<compile_context>
chip_gen: v7x
topology: tpu7x:2x2x1
jax: 0.10.0
libtpu: 0.0.40
codegen_flags: <defaults>
</compile_context>

<pallas_src>
import jax
import jax.numpy as jnp
from jax.experimental import pallas as pl
from jax.experimental.pallas import tpu as pltpu

# ----------------------------- problem sizes ------------------------------
N = 16       # graph nodes
E = 32       # edges in the base DTI graph
F = 8        # node feature dim
H = 32       # hidden dim
OUT = 2      # model output dim
B = 4        # SHAP batch size (number of edge_attr perturbations)

OUT_PAD = 128  # lane-dense output width (sliced back to OUT in the wrapper)


def _round_up(x, m):
    return ((x + m - 1) // m) * m


# ------------------------------- kernel -----------------------------------
def edge_shap_kernel(
    ea_ref,      # (TB, KP)       edge attrs + constant-1 bias column (+ zero pad)
    M_ref,       # (KP, N*H)      folded  T-scaled (S^T X W1d)  + bias row
    W2_ref,      # (N*H, OUT_PAD) folded  mean-pool + DTI head (zero-padded lanes)
    c_ref,       # (1, OUT_PAD)   hoisted fMRI contribution + b2 (zero-padded)
    out_ref,     # (TB, OUT_PAD)
):
    # Stage 1: all N node-rows of all TB samples in one lane-dense matmul,
    # bias already folded in via the constant-1 column of ea.
    h = jnp.maximum(
        jnp.dot(ea_ref[...], M_ref[...], preferred_element_type=jnp.float32),
        0.0,
    )                                                          # (TB, N*H)
    # Stage 2: mean-pool over nodes + DTI head, folded into one matmul.
    out_ref[...] = (
        jnp.dot(h, W2_ref[...], preferred_element_type=jnp.float32)
        + c_ref[...]
    )                                                          # (TB, OUT_PAD)


# ------------------------------- wrapper -----------------------------------
@jax.jit
def edge_shap_wrapper_dti(edge_attr_batch_dti, params):
    """edge_attr_batch_dti: (B, E) float32 -> (B, OUT) float32."""
    (S, T, x_dti, x_fmri, A_fmri, W1d, b1d, W1f, b1f, W2, b2) = params
    b = edge_attr_batch_dti.shape[0]
    n_nodes, n_edges = T.shape
    hidden = W1d.shape[1]
    out_dim = W2.shape[1]

    # ---- batch-invariant precompute (constant-folded under jit) ----
    # M = S^T @ X_dti @ W1d : (E, H);  M_stack[:, n*H:(n+1)*H] = T[n,:,None]*M
    M = (S.T @ x_dti) @ W1d                                             # (E, H)
    M_stack = (T.T[:, :, None] * M[:, None, :]).reshape(
        n_edges, n_nodes * hidden
    )                                                                   # (E, N*H)
    b1d_tiled = jnp.tile(b1d.reshape(1, hidden), (1, n_nodes))          # (1, N*H)

    # Fold the bias into the matmul (ea gets a constant-1 column); pad the
    # contraction dim to a multiple of 8 with zeros.
    KP = _round_up(n_edges + 1, 8)
    M_aug = jnp.zeros((KP, n_nodes * hidden), jnp.float32)
    M_aug = M_aug.at[:n_edges].set(M_stack).at[n_edges].set(b1d_tiled[0])

    # Mean-pool + DTI head folded into one lane-dense operand.
    W2d = W2[:hidden]                                                   # (H, OUT)
    W2head = jnp.tile(W2d / jnp.float32(n_nodes), (n_nodes, 1))         # (N*H, OUT)
    W2head_pad = (
        jnp.zeros((n_nodes * hidden, OUT_PAD), jnp.float32)
        .at[:, :out_dim]
        .set(W2head)
    )

    # Hoisted, batch-invariant fMRI branch -> constant bias c.
    h_f = jax.nn.relu(A_fmri @ x_fmri @ W1f + b1f)                      # (N, H)
    pool_f = jnp.mean(h_f, axis=0, keepdims=True)                       # (1, H)
    c = pool_f @ W2[hidden:] + b2                                       # (1, OUT)
    c_pad = jnp.zeros((1, OUT_PAD), jnp.float32).at[:, :out_dim].set(c)

    # ---- batch blocking: >=2 grid steps when the batch allows it ----
    b_pad = _round_up(b, 8)
    if b_pad >= 16:
        n_blocks = max(2, -(-b_pad // 256))   # split for v7x's 2 TensorCores
    else:
        n_blocks = 1
    TB = _round_up(-(-b_pad // n_blocks), 8)
    b_pad = n_blocks * TB

    ea = jnp.zeros((b_pad, KP), jnp.float32)
    ea = ea.at[:b, :n_edges].set(edge_attr_batch_dti.astype(jnp.float32))
    ea = ea.at[:, n_edges].set(1.0)           # constant-1 column (bias fold)

    out = pl.pallas_call(
        edge_shap_kernel,
        out_shape=jax.ShapeDtypeStruct((b_pad, OUT_PAD), jnp.float32),
        grid=(n_blocks,),
        in_specs=[
            pl.BlockSpec((TB, KP), lambda i: (i, 0)),
            pl.BlockSpec((KP, n_nodes * hidden), lambda i: (0, 0)),
            pl.BlockSpec((n_nodes * hidden, OUT_PAD), lambda i: (0, 0)),
            pl.BlockSpec((1, OUT_PAD), lambda i: (0, 0)),
        ],
        out_specs=pl.BlockSpec((TB, OUT_PAD), lambda i: (i, 0)),
        compiler_params=pltpu.CompilerParams(
            dimension_semantics=("parallel",)
        ),
    )(ea, M_aug, W2head_pad, c_pad)

    # torch.stack([out.squeeze(0) for ...]) -> (B, OUT); drop batch + lane pad.
    return out[:b, :out_dim]


def make_params(key):
    """Deterministic base-graph data + synthetic model weights."""
    keys = jax.random.split(key, 10)

    # Base DTI graph topology: E edges among N nodes (fixed edge_index).
    src = jax.random.randint(keys[0], (E,), 0, N)
    dst = jax.random.randint(keys[1], (E,), 0, N)
    S = jax.nn.one_hot(src, N, dtype=jnp.float32).T        # (N, E)
    T = jax.nn.one_hot(dst, N, dtype=jnp.float32).T        # (N, E)

    x_dti = jax.random.normal(keys[2], (N, F), dtype=jnp.float32)
    x_fmri = jax.random.normal(keys[3], (N, F), dtype=jnp.float32)
    A_fmri = jax.random.uniform(keys[4], (N, N), dtype=jnp.float32)

    scale = 0.1
    W1d = scale * jax.random.normal(keys[5], (F, H), dtype=jnp.float32)
    b1d = jnp.zeros((1, H), dtype=jnp.float32)
    W1f = scale * jax.random.normal(keys[6], (F, H), dtype=jnp.float32)
    b1f = jnp.zeros((1, H), dtype=jnp.float32)
    W2 = scale * jax.random.normal(keys[7], (2 * H, OUT), dtype=jnp.float32)
    b2 = jnp.zeros((1, OUT), dtype=jnp.float32)

    return (S, T, x_dti, x_fmri, A_fmri, W1d, b1d, W1f, b1f, W2, b2)


def reference(edge_attr_batch_dti, params):
    """Pure-JAX reference (mirrors the original per-sample module exactly)."""
    (S, T, x_dti, x_fmri, A_fmri, W1d, b1d, W1f, b1f, W2, b2) = params

    def one(ea):
        a_dti = (T * ea[None, :]) @ S.T
        h_d = jax.nn.relu(a_dti @ x_dti @ W1d + b1d)
        h_f = jax.nn.relu(A_fmri @ x_fmri @ W1f + b1f)
        feat = jnp.concatenate(
            [h_d.mean(0, keepdims=True), h_f.mean(0, keepdims=True)], axis=-1
        )
        return (feat @ W2 + b2)[0]

    return jax.vmap(one)(edge_attr_batch_dti)


if __name__ == "__main__":
    key = jax.random.PRNGKey(0)
    k_param, k_edge = jax.random.split(key)

    params = make_params(k_param)
    edge_attr_batch = jax.random.uniform(k_edge, (B, E), dtype=jnp.float32)

    out = edge_shap_wrapper_dti(edge_attr_batch, params)
    out = jax.block_until_ready(out)

    ref = reference(edge_attr_batch, params)
    assert out.shape == (B, OUT)
    assert jnp.allclose(out, ref, atol=1e-4, rtol=1e-4)

    print("KERNEL_OK")
</pallas_src>

<mosaic_0001>
module attributes {stable_mosaic.version = 11 : i64} {
  func.func @edge_shap_kernel(%arg0: i32, %arg1: memref<8x40xf32, #tpu.memory_space<vmem>>, %arg2: memref<40x512xf32, #tpu.memory_space<vmem>>, %arg3: memref<512x128xf32, #tpu.memory_space<vmem>>, %arg4: memref<1x128xf32, #tpu.memory_space<vmem>>, %arg5: memref<8x128xf32, #tpu.memory_space<vmem>>) attributes {dimension_semantics = [#tpu.dimension_semantics<parallel>], iteration_bounds = array<i64: 1>, scalar_prefetch = 0 : i64, scratch_operands = 0 : i64, tpu.core_type = #tpu.core_type<tc>, window_params = [{transform_indices = @transform_0, window_bounds = array<i64: 8, 40>}, {pipeline_mode = #tpu.pipeline_mode<synchronous>, transform_indices = @transform_1, window_bounds = array<i64: 40, 512>}, {pipeline_mode = #tpu.pipeline_mode<synchronous>, transform_indices = @transform_2, window_bounds = array<i64: 512, 128>}, {pipeline_mode = #tpu.pipeline_mode<synchronous>, transform_indices = @transform_3, window_bounds = array<i64: 1, 128>}, {transform_indices = @transform_4, window_bounds = array<i64: 8, 128>}]} {
    %c0 = arith.constant 0 : index
    %c0_0 = arith.constant 0 : index
    %0 = vector.load %arg1[%c0, %c0_0] : memref<8x40xf32, #tpu.memory_space<vmem>>, vector<8x40xf32>
    %c0_1 = arith.constant 0 : index
    %c0_2 = arith.constant 0 : index
    %1 = vector.load %arg2[%c0_1, %c0_2] : memref<40x512xf32, #tpu.memory_space<vmem>>, vector<40x512xf32>
    %cst = arith.constant dense<0.000000e+00> : vector<8x512xf32>
    %2 = tpu.matmul %0, %1, %cst {dimension_numbers = #tpu.dot_dimension_numbers<[1], [0], [0], [1], [0, 0, 1, 1], [], []>} : vector<8x40xf32>, vector<40x512xf32>, vector<8x512xf32> -> vector<8x512xf32>
    %cst_3 = arith.constant 0.000000e+00 : f32
    %3 = vector.broadcast %cst_3 : f32 to vector<8x512xf32>
    %4 = arith.maximumf %2, %3 : vector<8x512xf32>
    %c0_4 = arith.constant 0 : index
    %c0_5 = arith.constant 0 : index
    %5 = vector.load %arg3[%c0_4, %c0_5] : memref<512x128xf32, #tpu.memory_space<vmem>>, vector<512x128xf32>
    %cst_6 = arith.constant dense<0.000000e+00> : vector<8x128xf32>
    %6 = tpu.matmul %4, %5, %cst_6 {dimension_numbers = #tpu.dot_dimension_numbers<[1], [0], [0], [1], [0, 0, 1, 1], [], []>} : vector<8x512xf32>, vector<512x128xf32>, vector<8x128xf32> -> vector<8x128xf32>
    %c0_7 = arith.constant 0 : index
    %c0_8 = arith.constant 0 : index
    %7 = vector.load %arg4[%c0_7, %c0_8] : memref<1x128xf32, #tpu.memory_space<vmem>>, vector<1x128xf32>
    %8 = vector.broadcast %7 : vector<1x128xf32> to vector<8x128xf32>
    %9 = arith.addf %6, %8 : vector<8x128xf32>
    %c0_9 = arith.constant 0 : index
    %c0_10 = arith.constant 0 : index
    %10 = vector.load %arg5[%c0_9, %c0_10] : memref<8x128xf32, #tpu.memory_space<vmem>>, vector<8x128xf32>
    tpu.vector_store %arg5[%c0_9, %c0_10], %9 {strides = array<i32>} : memref<8x128xf32, #tpu.memory_space<vmem>>, vector<8x128xf32>,
    return
  }
  func.func @transform_0(%arg0: i32) -> (i32, i32) {
    %c0_i32 = arith.constant 0 : i32
    %c0_i32_0 = arith.constant 0 : i32
    return %arg0, %c0_i32 : i32, i32
  }
  func.func @transform_1(%arg0: i32) -> (i32, i32) {
    %c0_i32 = arith.constant 0 : i32
    %c0_i32_0 = arith.constant 0 : i32
    %c0_i32_1 = arith.constant 0 : i32
    return %c0_i32, %c0_i32_0 : i32, i32
  }
  func.func @transform_2(%arg0: i32) -> (i32, i32) {
    %c0_i32 = arith.constant 0 : i32
    %c0_i32_0 = arith.constant 0 : i32
    %c0_i32_1 = arith.constant 0 : i32
    return %c0_i32, %c0_i32_0 : i32, i32
  }
  func.func @transform_3(%arg0: i32) -> (i32, i32) {
    %c0_i32 = arith.constant 0 : i32
    %c0_i32_0 = arith.constant 0 : i32
    %c0_i32_1 = arith.constant 0 : i32
    return %c0_i32, %c0_i32_0 : i32, i32
  }
  func.func @transform_4(%arg0: i32) -> (i32, i32) {
    %c0_i32 = arith.constant 0 : i32
    %c0_i32_0 = arith.constant 0 : i32
    return %arg0, %c0_i32 : i32, i32
  }
}

</mosaic_0001>

<llo_original>
// kernel: edge_shap_wrapper_dti.1
$region0: #{edge_shap_wrapper_dti.1}
  #allocation0 [shape = 'u32[]', space=smem, size = 0x4, offset = 0x4, fixed_abs, tag = 'smem constant byte address 0x4 - core index']
  #allocation1 [shape = 'u32[144,128]{1,0:T(1,128)}', space=vmem, size = 0x12000, scoped, tag = 'internal scratch']
  %s0 = inlined_call_operand.vmem [shape: f32[8,40], index: 0, kind: input, shape index: {}]
  %s1 = inlined_call_operand.vmem [shape: f32[40,512], index: 1, kind: input, shape index: {}]
  %s2 = inlined_call_operand.vmem [shape: f32[512,128], index: 2, kind: input, shape index: {}]
  %s3 = inlined_call_operand.vmem [shape: f32[1,128], index: 3, kind: input, shape index: {}]
  %s4 = inlined_call_operand.vmem [shape: f32[8,128], index: 4, kind: output, shape index: {}]
  %s5 = sld [smem:[#allocation0]]
  $region26: #{edge_shap_wrapper_dti.1} parent=0
    _
  %s7 = ssub.s32 1, %s5
  %s8 = scalar_select 0, %s7, %s5
  // Predicated region
  $region2: #{edge_shap_wrapper_dti.1} parent=0 // pred_check
    _
  $region3: #{edge_shap_wrapper_dti.1} parent=0 // pred_check_branch
    %10 = sbr.rel (0) target = $region5
  $region4: #{edge_shap_wrapper_dti.1} parent=0 // pred_region
    _
  $region5: #{edge_shap_wrapper_dti.1} parent=0 // pred_fallthru
    _
  // Predicated region
  $region6: #{edge_shap_wrapper_dti.1} parent=0 // pred_check
    _
  $region7: #{edge_shap_wrapper_dti.1} parent=0 // pred_check_branch
    %12 = sbr.rel (0) target = $region9
  $region8: #{edge_shap_wrapper_dti.1} parent=0 // pred_region
    _
  $region9: #{edge_shap_wrapper_dti.1} parent=0 // pred_fallthru
    _
  // Predicated region
  $region10: #{edge_shap_wrapper_dti.1} parent=0 // pred_check
    _
  $region11: #{edge_shap_wrapper_dti.1} parent=0 // pred_check_branch
    %14 = sbr.rel (0) target = $region13
  $region12: #{edge_shap_wrapper_dti.1} parent=0 // pred_region
    _
  $region13: #{edge_shap_wrapper_dti.1} parent=0 // pred_fallthru
    _
  // Predicated region
  $region14: #{edge_shap_wrapper_dti.1} parent=0 // pred_check
    _
  $region15: #{edge_shap_wrapper_dti.1} parent=0 // pred_check_branch
    %16 = sbr.rel (0) target = $region17
  $region16: #{edge_shap_wrapper_dti.1} parent=0 // pred_region
    _
  $region17: #{edge_shap_wrapper_dti.1} parent=0 // pred_fallthru
    _
  %v17 = vld [vmem:[%s0] sm:$0xff]
  %v18 = vld [vmem:[%s1] sm:$0xff]
  %v19 = vld [vmem:[%s1 + $0x8] sm:$0xff]
  %v20 = vld [vmem:[%s1 + $0x10] sm:$0xff]
  %v21 = vld [vmem:[%s1 + $0x18] sm:$0xff]
  %v22 = vld [vmem:[%s1 + $0x20] sm:$0xff]
  %v23 = vld [vmem:[%s1 + $0x28] sm:$0xff]
  %v24 = vld [vmem:[%s1 + $0x30] sm:$0xff]
  %v25 = vld [vmem:[%s1 + $0x38] sm:$0xff]
  %v26 = vld [vmem:[%s1 + $0x40] sm:$0xff]
  %v27 = vld [vmem:[%s1 + $0x48] sm:$0xff]
  %v28 = vld [vmem:[%s1 + $0x50] sm:$0xff]
  %v29 = vld [vmem:[%s1 + $0x58] sm:$0xff]
  %v30 = vld [vmem:[%s1 + $0x60] sm:$0xff]
  %v31 = vld [vmem:[%s1 + $0x68] sm:$0xff]
  %v32 = vld [vmem:[%s1 + $0x70] sm:$0xff]
  %v33 = vld [vmem:[%s1 + $0x78] sm:$0xff]
  %v34 = vld [vmem:[%s1 + $0x80] sm:$0xff]
  %v35 = vld [vmem:[%s1 + $0x88] sm:$0xff]
  %v36 = vld [vmem:[%s1 + $0x90] sm:$0xff]
  %v37 = vld [vmem:[%s1 + $0x98] sm:$0xff]
  %vm38 = vcmask 326656
  %v40 = vsel %vm38, %v17, 0
  %42 = vmatprep.subr.mxu0 %v19
  %43 = vmatpush1.msra.mxu0 %v18
  %44 = vmatprep.subr.mxu0 %v23
  %45 = vmatpush1.msra.mxu0 %v22
  %46 = vmatprep.subr.mxu0 %v27
  %47 = vmatpush1.msra.mxu0 %v26
  %48 = vmatprep.subr.mxu0 %v31
  %49 = vmatpush1.msra.mxu0 %v30
  %50 = vmatprep.subr.mxu0 %v35
  %51 = vmatpush1.msra.mxu0 %v34
  %52 = vmatprep.subr.mxu0 0.0
  %53 = vmatpush1.msra.mxu0 0.0
  %54 = vmatprep.subr.mxu0 0.0
  %55 = vmatpush1.msra.mxu0 0.0
  %56 = vmatprep.subr.mxu0 0.0
  %57 = vmatpush1.msra.mxu0 0.0
  %58 = vmatprep.subr.mxu0 0.0
  %59 = vmatpush1.msra.mxu0 0.0
  %60 = vmatprep.subr.mxu0 0.0
  %61 = vmatpush1.msra.mxu0 0.0
  %62 = vmatprep.subr.mxu0 0.0
  %63 = vmatpush1.msra.mxu0 0.0
  %64 = vmatprep.subr.mxu0 0.0
  %65 = vmatpush1.msra.mxu0 0.0
  %66 = vmatprep.subr.mxu0 0.0
  %67 = vmatpush1.msra.mxu0 0.0
  %68 = vmatprep.subr.mxu0 0.0
  %69 = vmatpush1.msra.mxu0 0.0
  %70 = vmatprep.subr.mxu0 0.0
  %71 = vmatpush1.msra.mxu0 0.0
  %72 = vmatprep.subr.mxu0 0.0
  %73 = vmatpush1.msra.mxu0 0.0
  %74 = vmatprep.subr.mxu0 0.0
  %75 = vmatpush1.msra.mxu0 0.0
  %76 = vmatprep.subr.mxu0 0.0
  %77 = vmatpush1.msra.mxu0 0.0
  %78 = vmatprep.subr.mxu0 0.0
  %79 = vmatpush1.msra.mxu0 0.0
  %80 = vmatprep.subr.mxu0 0.0
  %81 = vmatpush1.msra.mxu0 0.0
  %82 = vmatprep.subr.mxu0 0.0
  %83 = vmatpush1.msra.mxu0 0.0
  %84 = vmatprep.subr.mxu0 0.0
  %85 = vmatpush1.msra.mxu0 0.0
  %86 = vmatprep.subr.mxu0 0.0
  %87 = vmatpush1.msra.mxu0 0.0
  %88 = vmatprep.subr.mxu0 0.0
  %89 = vmatpush1.msra.mxu0 0.0
  %90 = vmatprep.subr.mxu0 0.0
  %91 = vmatpush1.msra.mxu0 0.0
  %92 = vmatprep.subr.mxu0 0.0
  %93 = vmatpush1.msra.mxu0 0.0
  %94 = vmatprep.subr.mxu0 0.0
  %95 = vmatpush1.msra.mxu0 0.0
  %96 = vmatprep.subr.mxu0 0.0
  %97 = vmatpush1.msra.mxu0 0.0
  %98 = vmatprep.subr.mxu0 0.0
  %99 = vmatpush1.msra.mxu0 0.0
  %100 = vmatprep.subr.mxu0 0.0
  %101 = vmatpush1.msra.mxu0 0.0
  %102 = vmatprep.subr.mxu0 0.0
  %103 = vmatpush1.msra.mxu0 0.0
  %104 = vmatprep.subr.mxu0 0.0
  %105 = vmatpush1.msra.mxu0 0.0
  %106 = vmatprep.mubr.f32.mxu0 0.0
  %107 = vmatmul.mubr.f32.gmra.mrb[0].mxu0 %v40
  %v108 = vpop.f32.mrb[0].mxu0
  %v109 = vadd.f32 0.0, %v108
  %v110 = vpop.f32.mrb[0].mxu0
  %v111 = vadd.f32 0.0, %v110
  %112 = vdwg.mxu0
  %113 = vmatprep.subr.mxu0 %v21
  %114 = vmatpush1.msra.mxu0 %v20
  %115 = vmatprep.subr.mxu0 %v25
  %116 = vmatpush1.msra.mxu0 %v24
  %117 = vmatprep.subr.mxu0 %v29
  %118 = vmatpush1.msra.mxu0 %v28
  %119 = vmatprep.subr.mxu0 %v33
  %120 = vmatpush1.msra.mxu0 %v32
  %121 = vmatprep.subr.mxu0 %v37
  %122 = vmatpush1.msra.mxu0 %v36
  %123 = vmatprep.subr.mxu0 0.0
  %124 = vmatpush1.msra.mxu0 0.0
  %125 = vmatprep.subr.mxu0 0.0
  %126 = vmatpush1.msra.mxu0 0.0
  %127 = vmatprep.subr.mxu0 0.0
  %128 = vmatpush1.msra.mxu0 0.0
  %129 = vmatprep.subr.mxu0 0.0
  %130 = vmatpush1.msra.mxu0 0.0
  %131 = vmatprep.subr.mxu0 0.0
  %132 = vmatpush1.msra.mxu0 0.0
  %133 = vmatprep.subr.mxu0 0.0
  %134 = vmatpush1.msra.mxu0 0.0
  %135 = vmatprep.subr.mxu0 0.0
  %136 = vmatpush1.msra.mxu0 0.0
  %137 = vmatprep.subr.mxu0 0.0
  %138 = vmatpush1.msra.mxu0 0.0
  %139 = vmatprep.subr.mxu0 0.0
  %140 = vmatpush1.msra.mxu0 0.0
  %141 = vmatprep.subr.mxu0 0.0
  %142 = vmatpush1.msra.mxu0 0.0
  %143 = vmatprep.subr.mxu0 0.0
  %144 = vmatpush1.msra.mxu0 0.0
  %145 = vmatprep.subr.mxu0 0.0
  %146 = vmatpush1.msra.mxu0 0.0
  %147 = vmatprep.subr.mxu0 0.0
  %148 = vmatpush1.msra.mxu0 0.0
  %149 = vmatprep.subr.mxu0 0.0
  %150 = vmatpush1.msra.mxu0 0.0
  %151 = vmatprep.subr.mxu0 0.0
  %152 = vmatpush1.msra.mxu0 0.0
  %153 = vmatprep.subr.mxu0 0.0
  %154 = vmatpush1.msra.mxu0 0.0
  %155 = vmatprep.subr.mxu0 0.0
  %156 = vmatpush1.msra.mxu0 0.0
  %157 = vmatprep.subr.mxu0 0.0
  %158 = vmatpush1.msra.mxu0 0.0
  %159 = vmatprep.subr.mxu0 0.0
  %160 = vmatpush1.msra.mxu0 0.0
  %161 = vmatprep.subr.mxu0 0.0
  %162 = vmatpush1.msra.mxu0 0.0
  %163 = vmatprep.subr.mxu0 0.0
  %164 = vmatpush1.msra.mxu0 0.0
  %165 = vmatprep.subr.mxu0 0.0
  %166 = vmatpush1.msra.mxu0 0.0
  %167 = vmatprep.subr.mxu0 0.0
  %168 = vmatpush1.msra.mxu0 0.0
  %169 = vmatprep.subr.mxu0 0.0
  %170 = vmatpush1.msra.mxu0 0.0
  %171 = vmatprep.subr.mxu0 0.0
  %172 = vmatpush1.msra.mxu0 0.0
  %173 = vmatprep.subr.mxu0 0.0
  %174 = vmatpush1.msra.mxu0 0.0
  %175 = vmatprep.subr.mxu0 0.0
  %176 = vmatpush1.msra.mxu0 0.0
  %177 = vmatprep.mubr.f32.mxu0 0.0
  %178 = vmatmul.mubr.f32.gmra.mrb[0].mxu0 %v40
  %v179 = vpop.f32.mrb[0].mxu0
  %v180 = vadd.f32 0.0, %v179
  %v181 = vpop.f32.mrb[0].mxu0
  %v182 = vadd.f32 0.0, %v181
  %183 = vdwg.mxu0
  %v184 = vmax.f32 %v109, 0.0
  %v185 = vmax.f32 %v111, 0.0
  %v186 = vmax.f32 %v180, 0.0
  %v187 = vmax.f32 %v182, 0.0
  %v188 = vld [vmem:[%s2] sm:$0xff]
  %v189 = vld [vmem:[%s2 + $0x8] sm:$0xff]
  %v190 = vld [vmem:[%s2 + $0x10] sm:$0xff]
  %v191 = vld [vmem:[%s2 + $0x18] sm:$0xff]
  %v192 = vld [vmem:[%s2 + $0x20] sm:$0xff]
  %v193 = vld [vmem:[%s2 + $0x28] sm:$0xff]
  %v194 = vld [vmem:[%s2 + $0x30] sm:$0xff]
  %v195 = vld [vmem:[%s2 + $0x38] sm:$0xff]
  %v196 = vld [vmem:[%s2 + $0x40] sm:$0xff]
  %v197 = vld [vmem:[%s2 + $0x48] sm:$0xff]
  %v198 = vld [vmem:[%s2 + $0x50] sm:$0xff]
  %v199 = vld [vmem:[%s2 + $0x58] sm:$0xff]
  %v200 = vld [vmem:[%s2 + $0x60] sm:$0xff]
  %v201 = vld [vmem:[%s2 + $0x68] sm:$0xff]
  %v202 = vld [vmem:[%s2 + $0x70] sm:$0xff]
  %v203 = vld [vmem:[%s2 + $0x78] sm:$0xff]
  %v204 = vld [vmem:[%s2 + $0x80] sm:$0xff]
  %v205 = vld [vmem:[%s2 + $0x88] sm:$0xff]
  %v206 = vld [vmem:[%s2 + $0x90] sm:$0xff]
  %v207 = vld [vmem:[%s2 + $0x98] sm:$0xff]
  %v208 = vld [vmem:[%s2 + $0xa0] sm:$0xff]
  %v209 = vld [vmem:[%s2 + $0xa8] sm:$0xff]
  %v210 = vld [vmem:[%s2 + $0xb0] sm:$0xff]
  %v211 = vld [vmem:[%s2 + $0xb8] sm:$0xff]
  %v212 = vld [vmem:[%s2 + $0xc0] sm:$0xff]
  %v213 = vld [vmem:[%s2 + $0xc8] sm:$0xff]
  %v214 = vld [vmem:[%s2 + $0xd0] sm:$0xff]
  %v215 = vld [vmem:[%s2 + $0xd8] sm:$0xff]
  %v216 = vld [vmem:[%s2 + $0xe0] sm:$0xff]
  %v217 = vld [vmem:[%s2 + $0xe8] sm:$0xff]
  %v218 = vld [vmem:[%s2 + $0xf0] sm:$0xff]
  %v219 = vld [vmem:[%s2 + $0xf8] sm:$0xff]
  %v220 = vld [vmem:[%s2 + $0x100] sm:$0xff]
  %v221 = vld [vmem:[%s2 + $0x108] sm:$0xff]
  %v222 = vld [vmem:[%s2 + $0x110] sm:$0xff]
  %v223 = vld [vmem:[%s2 + $0x118] sm:$0xff]
  %v224 = vld [vmem:[%s2 + $0x120] sm:$0xff]
  %v225 = vld [vmem:[%s2 + $0x128] sm:$0xff]
  %v226 = vld [vmem:[%s2 + $0x130] sm:$0xff]
  %v227 = vld [vmem:[%s2 + $0x138] sm:$0xff]
  %v228 = vld [vmem:[%s2 + $0x140] sm:$0xff]
  %v229 = vld [vmem:[%s2 + $0x148] sm:$0xff]
  %v230 = vld [vmem:[%s2 + $0x150] sm:$0xff]
  %v231 = vld [vmem:[%s2 + $0x158] sm:$0xff]
  %v232 = vld [vmem:[%s2 + $0x160] sm:$0xff]
  %v233 = vld [vmem:[%s2 + $0x168] sm:$0xff]
  %v234 = vld [vmem:[%s2 + $0x170] sm:$0xff]
  %v235 = vld [vmem:[%s2 + $0x178] sm:$0xff]
  %v236 = vld [vmem:[%s2 + $0x180] sm:$0xff]
  %v237 = vld [vmem:[%s2 + $0x188] sm:$0xff]
  %v238 = vld [vmem:[%s2 + $0x190] sm:$0xff]
  %v239 = vld [vmem:[%s2 + $0x198] sm:$0xff]
  %v240 = vld [vmem:[%s2 + $0x1a0] sm:$0xff]
  %v241 = vld [vmem:[%s2 + $0x1a8] sm:$0xff]
  %v242 = vld [vmem:[%s2 + $0x1b0] sm:$0xff]
  %v243 = vld [vmem:[%s2 + $0x1b8] sm:$0xff]
  %v244 = vld [vmem:[%s2 + $0x1c0] sm:$0xff]
  %v245 = vld [vmem:[%s2 + $0x1c8] sm:$0xff]
  %v246 = vld [vmem:[%s2 + $0x1d0] sm:$0xff]
  %v247 = vld [vmem:[%s2 + $0x1d8] sm:$0xff]
  %v248 = vld [vmem:[%s2 + $0x1e0] sm:$0xff]
  %v249 = vld [vmem:[%s2 + $0x1e8] sm:$0xff]
  %v250 = vld [vmem:[%s2 + $0x1f0] sm:$0xff]
  %v251 = vld [vmem:[%s2 + $0x1f8] sm:$0xff]
  %v252 = vld [vmem:[%s3] sm:$0x1]
  %v254 = vlaneseq
  %v255 = vshrl.u32 %v254, 7
  %v256 = vsub.s32 0, %v255
  %v257 = vrot.slane %v252, %v256
  %259 = vmatprep.subr.mxu0 0.0
  %260 = vmatpush1.msra.mxu0 %v188
  %261 = vmatprep.subr.mxu0 0.0
  %262 = vmatpush1.msra.mxu0 %v189
  %263 = vmatprep.subr.mxu0 0.0
  %264 = vmatpush1.msra.mxu0 %v190
  %265 = vmatprep.subr.mxu0 0.0
  %266 = vmatpush1.msra.mxu0 %v191
  %267 = vmatprep.subr.mxu0 0.0
  %268 = vmatpush1.msra.mxu0 %v192
  %269 = vmatprep.subr.mxu0 0.0
  %270 = vmatpush1.msra.mxu0 %v193
  %271 = vmatprep.subr.mxu0 0.0
  %272 = vmatpush1.msra.mxu0 %v194
  %273 = vmatprep.subr.mxu0 0.0
  %274 = vmatpush1.msra.mxu0 %v195
  %275 = vmatprep.subr.mxu0 0.0
  %276 = vmatpush1.msra.mxu0 %v196
  %277 = vmatprep.subr.mxu0 0.0
  %278 = vmatpush1.msra.mxu0 %v197
  %279 = vmatprep.subr.mxu0 0.0
  %280 = vmatpush1.msra.mxu0 %v198
  %281 = vmatprep.subr.mxu0 0.0
  %282 = vmatpush1.msra.mxu0 %v199
  %283 = vmatprep.subr.mxu0 0.0
  %284 = vmatpush1.msra.mxu0 %v200
  %285 = vmatprep.subr.mxu0 0.0
  %286 = vmatpush1.msra.mxu0 %v201
  %287 = vmatprep.subr.mxu0 0.0
  %288 = vmatpush1.msra.mxu0 %v202
  %289 = vmatprep.subr.mxu0 0.0
  %290 = vmatpush1.msra.mxu0 %v203
  %291 = vmatprep.subr.mxu0 0.0
  %292 = vmatpush1.msra.mxu0 %v204
  %293 = vmatprep.subr.mxu0 0.0
  %294 = vmatpush1.msra.mxu0 %v205
  %295 = vmatprep.subr.mxu0 0.0
  %296 = vmatpush1.msra.mxu0 %v206
  %297 = vmatprep.subr.mxu0 0.0
  %298 = vmatpush1.msra.mxu0 %v207
  %299 = vmatprep.subr.mxu0 0.0
  %300 = vmatpush1.msra.mxu0 %v208
  %301 = vmatprep.subr.mxu0 0.0
  %302 = vmatpush1.msra.mxu0 %v209
  %303 = vmatprep.subr.mxu0 0.0
  %304 = vmatpush1.msra.mxu0 %v210
  %305 = vmatprep.subr.mxu0 0.0
  %306 = vmatpush1.msra.mxu0 %v211
  %307 = vmatprep.subr.mxu0 0.0
  %308 = vmatpush1.msra.mxu0 %v212
  %309 = vmatprep.subr.mxu0 0.0
  %310 = vmatpush1.msra.mxu0 %v213
  %311 = vmatprep.subr.mxu0 0.0
  %312 = vmatpush1.msra.mxu0 %v214
  %313 = vmatprep.subr.mxu0 0.0
  %314 = vmatpush1.msra.mxu0 %v215
  %315 = vmatprep.subr.mxu0 0.0
  %316 = vmatpush1.msra.mxu0 %v216
  %317 = vmatprep.subr.mxu0 0.0
  %318 = vmatpush1.msra.mxu0 %v217
  %319 = vmatprep.subr.mxu0 0.0
  %320 = vmatpush1.msra.mxu0 %v218
  %321 = vmatprep.subr.mxu0 0.0
  %322 = vmatpush1.msra.mxu0 %v219
  %323 = vmatprep.mubr.f32.mxu0 %v185
  %324 = vmatmul.mubr.f32.gmra.mrb[0].mxu0 %v184
  %v325 = vpop.f32.mrb[0].mxu0
  %v326 = vadd.f32 %v257, %v325
  %v327 = vpop.f32.mrb[0].mxu0
  %328 = vdwg.mxu0
  %329 = vmatprep.subr.mxu0 0.0
  %330 = vmatpush1.msra.mxu0 %v220
  %331 = vmatprep.subr.mxu0 0.0
  %332 = vmatpush1.msra.mxu0 %v221
  %333 = vmatprep.subr.mxu0 0.0
  %334 = vmatpush1.msra.mxu0 %v222
  %335 = vmatprep.subr.mxu0 0.0
  %336 = vmatpush1.msra.mxu0 %v223
  %337 = vmatprep.subr.mxu0 0.0
  %338 = vmatpush1.msra.mxu0 %v224
  %339 = vmatprep.subr.mxu0 0.0
  %340 = vmatpush1.msra.mxu0 %v225
  %341 = vmatprep.subr.mxu0 0.0
  %342 = vmatpush1.msra.mxu0 %v226
  %343 = vmatprep.subr.mxu0 0.0
  %344 = vmatpush1.msra.mxu0 %v227
  %345 = vmatprep.subr.mxu0 0.0
  %346 = vmatpush1.msra.mxu0 %v228
  %347 = vmatprep.subr.mxu0 0.0
  %348 = vmatpush1.msra.mxu0 %v229
  %349 = vmatprep.subr.mxu0 0.0
  %350 = vmatpush1.msra.mxu0 %v230
  %351 = vmatprep.subr.mxu0 0.0
  %352 = vmatpush1.msra.mxu0 %v231
  %353 = vmatprep.subr.mxu0 0.0
  %354 = vmatpush1.msra.mxu0 %v232
  %355 = vmatprep.subr.mxu0 0.0
  %356 = vmatpush1.msra.mxu0 %v233
  %357 = vmatprep.subr.mxu0 0.0
  %358 = vmatpush1.msra.mxu0 %v234
  %359 = vmatprep.subr.mxu0 0.0
  %360 = vmatpush1.msra.mxu0 %v235
  %361 = vmatprep.subr.mxu0 0.0
  %362 = vmatpush1.msra.mxu0 %v236
  %363 = vmatprep.subr.mxu0 0.0
  %364 = vmatpush1.msra.mxu0 %v237
  %365 = vmatprep.subr.mxu0 0.0
  %366 = vmatpush1.msra.mxu0 %v238
  %367 = vmatprep.subr.mxu0 0.0
  %368 = vmatpush1.msra.mxu0 %v239
  %369 = vmatprep.subr.mxu0 0.0
  %370 = vmatpush1.msra.mxu0 %v240
  %371 = vmatprep.subr.mxu0 0.0
  %372 = vmatpush1.msra.mxu0 %v241
  %373 = vmatprep.subr.mxu0 0.0
  %374 = vmatpush1.msra.mxu0 %v242
  %375 = vmatprep.subr.mxu0 0.0
  %376 = vmatpush1.msra.mxu0 %v243
  %377 = vmatprep.subr.mxu0 0.0
  %378 = vmatpush1.msra.mxu0 %v244
  %379 = vmatprep.subr.mxu0 0.0
  %380 = vmatpush1.msra.mxu0 %v245
  %381 = vmatprep.subr.mxu0 0.0
  %382 = vmatpush1.msra.mxu0 %v246
  %383 = vmatprep.subr.mxu0 0.0
  %384 = vmatpush1.msra.mxu0 %v247
  %385 = vmatprep.subr.mxu0 0.0
  %386 = vmatpush1.msra.mxu0 %v248
  %387 = vmatprep.subr.mxu0 0.0
  %388 = vmatpush1.msra.mxu0 %v249
  %389 = vmatprep.subr.mxu0 0.0
  %390 = vmatpush1.msra.mxu0 %v250
  %391 = vmatprep.subr.mxu0 0.0
  %392 = vmatpush1.msra.mxu0 %v251
  %393 = vmatprep.mubr.f32.mxu0 %v187
  %394 = vmatmul.mubr.f32.gmra.mrb[0].mxu0 %v186
  %v395 = vpop.f32.mrb[0].mxu0
  %v396 = vadd.f32 %v326, %v395
  %v397 = vpop.f32.mrb[0].mxu0
  %398 = vdwg.mxu0
  %399 = vst [vmem:[%s4] sm:$0xff] %v396
  // Predicated region
  $region18: #{edge_shap_wrapper_dti.1} parent=0 // pred_check
    _
  $region19: #{edge_shap_wrapper_dti.1} parent=0 // pred_check_branch
    %401 = sbr.rel (0) target = $region21
  $region20: #{edge_shap_wrapper_dti.1} parent=0 // pred_region
    _
  $region21: #{edge_shap_wrapper_dti.1} parent=0 // pred_fallthru
    _
  // Predicated region
  $region22: #{edge_shap_wrapper_dti.1} parent=0 // pred_check
    _
  $region23: #{edge_shap_wrapper_dti.1} parent=0 // pred_check_branch
    %403 = sbr.rel (0) target = $region25
  $region24: #{edge_shap_wrapper_dti.1} parent=0 // pred_region
    _
  $region25: #{edge_shap_wrapper_dti.1} parent=0 // pred_fallthru
    _

</llo_original>
